<compile_context>
chip_gen: v5e
topology: v5e:2x2
jax: 0.10.0
libtpu: 0.0.40
codegen_flags: <defaults>
</compile_context>

<pallas_src>
import functools

import jax
import jax.numpy as jnp
import numpy as np
from jax.experimental import pallas as pl
from jax.experimental.pallas import tpu as pltpu


# ----------------------------------------------------------------------------------
# TPU-generation detection (controls bf16 softmax path and VMEM budgeting).
# ----------------------------------------------------------------------------------
def _tpu_generation():
    try:
        kind = jax.devices()[0].device_kind.lower()
    except Exception:
        return 0
    import re
    m = re.search(r"(\d+)", kind)
    return int(m.group(1)) if m else 0


_GEN = _tpu_generation()
_USE_BF16_SOFTMAX = _GEN >= 6                    # v6e / v7x have bf16 VPU + EUP paths
if _GEN >= 7 or _GEN == 0:
    _VMEM_LIMIT = 48 * 1024 * 1024               # v7x: 64 MiB physical -> leave headroom
else:
    _VMEM_LIMIT = 96 * 1024 * 1024               # v5e / v6e: 128 MiB physical


# ----------------------------------------------------------------------------------
# Kernel
# ----------------------------------------------------------------------------------
def qnet_kernel(attn_p_ref, x_ref, w1_ref, b1_ref, w2_ref, b2_ref, w3_ref, b3_ref,
                out_ref, *, softmax_dtype):
    # x_ref:   (tile_n, L)  f32 -- batch rows on sublanes, sequence (keys) on lanes.
    # out_ref: (out_rows, tile_n * L) f32 -- lane-dense, n-major flattened row axis.
    tn, L = x_ref.shape
    x = x_ref[...]                                           # (tn, L)

    # ---- nn.MultiheadAttention(embed_dim=1, num_heads=1): scalar projections ----
    wq, wk, wv = attn_p_ref[0], attn_p_ref[1], attn_p_ref[2]
    bq, bk, bv = attn_p_ref[3], attn_p_ref[4], attn_p_ref[5]
    wo, bo = attn_p_ref[6], attn_p_ref[7]
    q = x * wq + bq
    k = x * wk + bk
    v = x * wv + bv
    # head_dim == 1 -> scale = 1/sqrt(1) = 1
    scores = q[:, :, None] * k[:, None, :]                   # (tn, L, L) f32, keys on lanes
    m = jnp.max(scores, axis=-1, keepdims=True)              # f32 for stability

    # bf16 inner math on v6e/v7x, f32 on v5e; reductions always accumulate in f32.
    e = jnp.exp((scores - m).astype(softmax_dtype))          # (tn, L, L)
    ev = e * v[:, None, :].astype(softmax_dtype)             # (tn, L, L)
    num = jnp.sum(ev.astype(jnp.float32), axis=-1)           # (tn, L)  f32 accumulation
    den = jnp.sum(e.astype(jnp.float32), axis=-1)            # (tn, L)  f32 accumulation
    # Deferred normalization; approx reciprocal rides the EUP slot (nearly free here).
    a = num * pl.reciprocal(den, approx=True)                # (tn, L)  == softmax(scores) @ v
    a = a * wo + bo                                          # out_proj

    # ---- MLP head, feature-major / lane-dense: rows on lanes, features on sublanes ----
    a_flat = a.reshape(1, tn * L)                            # tiny relayout
    h1 = jnp.maximum(w1_ref[...] * a_flat + b1_ref[...], 0.0)                # (16, M)
    h2 = jnp.maximum(
        jnp.dot(w2_ref[...], h1, preferred_element_type=jnp.float32)
        + b2_ref[...], 0.0)                                                  # (32, M)
    out_ref[...] = (
        jnp.dot(w3_ref[...], h2, preferred_element_type=jnp.float32)
        + b3_ref[...])                                                       # (out_rows, M)


# ----------------------------------------------------------------------------------
# Tiling / VMEM budgeting
# ----------------------------------------------------------------------------------
_TILE_CANDIDATES = (256, 128, 64, 32, 16, 8)     # largest-first


def _tile_vmem_bytes(tn, L, out_rows):
    """Conservative estimate of the per-step VMEM working set (bytes)."""
    attn = tn * L * L * 12                       # scores + e + e*v live copies (f32-equiv)
    mlp = tn * L * (1 + 16 + 32 + out_rows) * 4  # a / h1 / h2 / out temporaries
    io = 2 * tn * L * 4 + 2 * out_rows * tn * L * 4   # double-buffered in/out blocks
    return int((attn + mlp + io) * 1.25)         # fudge for compiler temporaries


def _pick_tile_n(N, L, out_rows, vmem_limit):
    """Largest batch tile that (a) satisfies the (8,128) BlockSpec rules for multi-tile
    grids and (b) keeps the attention working set inside a VMEM budget."""
    budget = int(vmem_limit * 0.45)

    if N * L <= 2048:                            # tiny problem: single tile, single step
        return N

    def ok(t):
        return (N % t == 0) and ((t * L) % 128 == 0) and \
            _tile_vmem_bytes(t, L, out_rows) <= budget

    # v7x: two TensorCores per chip -> prefer the largest tile that still gives >= 2 steps.
    if _GEN >= 7 and N >= 16:
        for t in _TILE_CANDIDATES:
            if t <= N // 2 and ok(t):
                return t

    for t in _TILE_CANDIDATES:                   # largest-first: fewer sequential grid steps
        if ok(t):
            return t

    if _tile_vmem_bytes(N, L, out_rows) <= budget:
        return N                                 # single full-array tile (always layout-legal)

    raise NotImplementedError(
        "Attention working set too large for VMEM at this (N, L). "
        "TODO(synk): switch to a flash-style online softmax over key blocks.")


# ----------------------------------------------------------------------------------
# Wrapper
# ----------------------------------------------------------------------------------
def graph_convoluted_qnet_forward(x, params):
    """x: (L, N, 1) float32 (PyTorch seq-first MHA convention). Returns (L, N, out_dim)."""
    attn_p, w1, b1, w2, b2, w3, b3 = params
    L, N, E = x.shape
    assert E == 1, "embed_dim of the attention layer is 1"
    out_dim = w3.shape[0]

    # Pad the output feature dim to full sublanes -> unmasked full-width stores.
    out_rows = ((out_dim + 7) // 8) * 8
    if out_rows != out_dim:
        w3 = jnp.pad(w3, ((0, out_rows - out_dim), (0, 0)))
        b3 = jnp.pad(b3, ((0, out_rows - out_dim), (0, 0)))

    # TODO(synk): this (L, N) -> (N, L) transpose could be folded into the kernel via an
    # (L, tile_n, 1) input block + in-kernel XLU transpose; kept host-side because a
    # (L, tile_n) lane-tiled block would violate the (8, 128) BlockSpec rule for
    # multi-tile grids, and the op is O(N*L) vs the kernel's O(N*L^2).
    x2d = jnp.transpose(x[..., 0], (1, 0))                   # (N, L), batch-major

    tile_n = _pick_tile_n(N, L, out_rows, _VMEM_LIMIT)
    assert N % tile_n == 0
    grid = (N // tile_n,)
    m_tile = tile_n * L

    kernel = functools.partial(
        qnet_kernel,
        softmax_dtype=jnp.bfloat16 if _USE_BF16_SOFTMAX else jnp.float32)

    out2d = pl.pallas_call(
        kernel,
        out_shape=jax.ShapeDtypeStruct((out_rows, N * L), jnp.float32),
        grid=grid,
        in_specs=[
            pl.BlockSpec(memory_space=pltpu.MemorySpace.SMEM),   # attn scalars (8,)
            pl.BlockSpec((tile_n, L), lambda i: (i, 0)),         # x (N, L) batch tile
            pl.BlockSpec((16, 1), lambda i: (0, 0)),             # w1  (out,in) = (16,1)
            pl.BlockSpec((16, 1), lambda i: (0, 0)),             # b1
            pl.BlockSpec((32, 16), lambda i: (0, 0)),            # w2  (32,16)
            pl.BlockSpec((32, 1), lambda i: (0, 0)),             # b2
            pl.BlockSpec((out_rows, 32), lambda i: (0, 0)),      # w3  (padded)
            pl.BlockSpec((out_rows, 1), lambda i: (0, 0)),       # b3  (padded)
        ],
        out_specs=pl.BlockSpec((out_rows, m_tile), lambda i: (0, i)),  # lane-dense tile
        compiler_params=pltpu.CompilerParams(
            dimension_semantics=("parallel",),     # independent batch tiles (v7x megacore)
            vmem_limit_bytes=_VMEM_LIMIT,
        ),
    )(attn_p, x2d, w1, b1, w2, b2, w3, b3)

    # (out_rows, N*L) -> slice real rows -> (L, N, out_dim); the reshape is a view.
    return out2d[:out_dim].reshape(out_dim, N, L).transpose(2, 1, 0)


# ----------------------------------------------------------------------------------
# Pure-JAX reference + parameter construction
# ----------------------------------------------------------------------------------
def reference_forward(x, params):
    """Pure-JAX reference matching the intended PyTorch semantics (all f32)."""
    attn_p, w1, b1, w2, b2, w3, b3 = params
    wq, wk, wv, bq, bk, bv, wo, bo = [attn_p[i] for i in range(8)]
    xs = jnp.transpose(x[..., 0], (1, 0))                    # (N, L)
    q, k, v = xs * wq + bq, xs * wk + bk, xs * wv + bv
    scores = q[:, :, None] * k[:, None, :]
    attn = jax.nn.softmax(scores, axis=-1)
    a = jnp.sum(attn * v[:, None, :], axis=-1) * wo + bo     # (N, L)
    h1 = jax.nn.relu(a[..., None] * w1[:, 0] + b1[:, 0])     # (N, L, 16)
    h2 = jax.nn.relu(jnp.einsum("nlk,ok->nlo", h1, w2) + b2[:, 0])
    out = jnp.einsum("nlk,ok->nlo", h2, w3) + b3[:, 0]
    return out.transpose(1, 0, 2)                            # (L, N, out_dim)


def make_params(key, input_dimension, output_dimension):
    # input_dimension must be 1: the attention output feature dim (embed_dim) is 1.
    assert input_dimension == 1
    ks = jax.random.split(key, 10)
    # MultiheadAttention(embed_dim=1, num_heads=1): in_proj (3,1)+(3,), out_proj (1,1)+(1,)
    in_proj_w = jax.random.normal(ks[0], (3,), jnp.float32) * 0.5    # [wq, wk, wv]
    in_proj_b = jax.random.normal(ks[1], (3,), jnp.float32) * 0.1    # [bq, bk, bv]
    out_proj_w = jax.random.normal(ks[2], (1,), jnp.float32) * 0.5   # [wo]
    out_proj_b = jax.random.normal(ks[3], (1,), jnp.float32) * 0.1   # [bo]
    attn_p = jnp.concatenate([in_proj_w, in_proj_b, out_proj_w, out_proj_b])  # (8,)
    # Linear weights in native PyTorch (out_features, in_features) orientation;
    # biases as (out_features, 1) columns so the kernel broadcasts over lanes.
    w1 = jax.random.normal(ks[4], (16, 1), jnp.float32) * 0.5
    b1 = jax.random.normal(ks[5], (16, 1), jnp.float32) * 0.1
    w2 = jax.random.normal(ks[6], (32, 16), jnp.float32) * 0.2
    b2 = jax.random.normal(ks[7], (32, 1), jnp.float32) * 0.1
    w3 = jax.random.normal(ks[8], (output_dimension, 32), jnp.float32) * 0.2
    b3 = jax.random.normal(ks[9], (output_dimension, 1), jnp.float32) * 0.1
    return (attn_p, w1, b1, w2, b2, w3, b3)


if __name__ == "__main__":
    key = jax.random.PRNGKey(0)
    k_param, k_x1, k_x2, k_x3 = jax.random.split(key, 4)

    input_dimension = 1       # attention output feature dim is embed_dim == 1
    output_dimension = 4      # number of Q-values / actions
    params = make_params(k_param, input_dimension, output_dimension)

    # bf16 softmax (v6e/v7x) loosens the comparison tolerance a bit.
    tol = dict(rtol=2e-2, atol=2e-2) if _USE_BF16_SOFTMAX else dict(rtol=5e-3, atol=5e-3)

    # 1) Small shape (single grid step): L=8 graph nodes, batch N=2.
    L, N = 8, 2
    x = jax.random.normal(k_x1, (L, N, 1), jnp.float32)
    out = jax.block_until_ready(graph_convoluted_qnet_forward(x, params))
    ref = reference_forward(x, params)
    np.testing.assert_allclose(np.asarray(out), np.asarray(ref), **tol)
    assert out.shape == (L, N, output_dimension)

    # 2) Medium shape: exercises the lane-dense (8, 4096) store path (>= 2 steps on v7x).
    L2, N2 = 256, 16
    x2 = jax.random.normal(k_x2, (L2, N2, 1), jnp.float32)
    out2 = jax.block_until_ready(graph_convoluted_qnet_forward(x2, params))
    ref2 = reference_forward(x2, params)
    np.testing.assert_allclose(np.asarray(out2), np.asarray(ref2), **tol)
    assert out2.shape == (L2, N2, output_dimension)

    # 3) Larger batch: exercises the VMEM-budgeted large-tile choice and the
    #    multi-step parallel grid on every generation.
    L3, N3 = 256, 64
    x3 = jax.random.normal(k_x3, (L3, N3, 1), jnp.float32)
    out3 = jax.block_until_ready(graph_convoluted_qnet_forward(x3, params))
    ref3 = reference_forward(x3, params)
    np.testing.assert_allclose(np.asarray(out3), np.asarray(ref3), **tol)
    assert out3.shape == (L3, N3, output_dimension)

    print("KERNEL_OK")
</pallas_src>

<mosaic_0001>
module attributes {stable_mosaic.version = 11 : i64} {
  func.func @qnet_kernel(%arg0: i32, %arg1: memref<8xf32, #tpu.memory_space<smem>>, %arg2: memref<2x8xf32, #tpu.memory_space<vmem>>, %arg3: memref<16x1xf32, #tpu.memory_space<vmem>>, %arg4: memref<16x1xf32, #tpu.memory_space<vmem>>, %arg5: memref<32x16xf32, #tpu.memory_space<vmem>>, %arg6: memref<32x1xf32, #tpu.memory_space<vmem>>, %arg7: memref<8x32xf32, #tpu.memory_space<vmem>>, %arg8: memref<8x1xf32, #tpu.memory_space<vmem>>, %arg9: memref<8x16xf32, #tpu.memory_space<vmem>>) attributes {dimension_semantics = [#tpu.dimension_semantics<parallel>], iteration_bounds = array<i64: 1>, scalar_prefetch = 0 : i64, scratch_operands = 0 : i64, tpu.core_type = #tpu.core_type<tc>, window_params = [{transform_indices = @transform_0, window_bounds = array<i64: 8>}, {transform_indices = @transform_1, window_bounds = array<i64: 2, 8>}, {pipeline_mode = #tpu.pipeline_mode<synchronous>, transform_indices = @transform_2, window_bounds = array<i64: 16, 1>}, {pipeline_mode = #tpu.pipeline_mode<synchronous>, transform_indices = @transform_3, window_bounds = array<i64: 16, 1>}, {pipeline_mode = #tpu.pipeline_mode<synchronous>, transform_indices = @transform_4, window_bounds = array<i64: 32, 16>}, {pipeline_mode = #tpu.pipeline_mode<synchronous>, transform_indices = @transform_5, window_bounds = array<i64: 32, 1>}, {pipeline_mode = #tpu.pipeline_mode<synchronous>, transform_indices = @transform_6, window_bounds = array<i64: 8, 32>}, {pipeline_mode = #tpu.pipeline_mode<synchronous>, transform_indices = @transform_7, window_bounds = array<i64: 8, 1>}, {transform_indices = @transform_8, window_bounds = array<i64: 8, 16>}]} {
    %c0 = arith.constant 0 : index
    %c0_0 = arith.constant 0 : index
    %0 = vector.load %arg2[%c0, %c0_0] : memref<2x8xf32, #tpu.memory_space<vmem>>, vector<2x8xf32>
    %c0_1 = arith.constant 0 : index
    %1 = memref.load %arg1[%c0_1] : memref<8xf32, #tpu.memory_space<smem>>
    %c1 = arith.constant 1 : index
    %2 = memref.load %arg1[%c1] : memref<8xf32, #tpu.memory_space<smem>>
    %c2 = arith.constant 2 : index
    %3 = memref.load %arg1[%c2] : memref<8xf32, #tpu.memory_space<smem>>
    %c3 = arith.constant 3 : index
    %4 = memref.load %arg1[%c3] : memref<8xf32, #tpu.memory_space<smem>>
    %c4 = arith.constant 4 : index
    %5 = memref.load %arg1[%c4] : memref<8xf32, #tpu.memory_space<smem>>
    %c5 = arith.constant 5 : index
    %6 = memref.load %arg1[%c5] : memref<8xf32, #tpu.memory_space<smem>>
    %c6 = arith.constant 6 : index
    %7 = memref.load %arg1[%c6] : memref<8xf32, #tpu.memory_space<smem>>
    %c7 = arith.constant 7 : index
    %8 = memref.load %arg1[%c7] : memref<8xf32, #tpu.memory_space<smem>>
    %9 = vector.broadcast %1 : f32 to vector<2x8xf32>
    %10 = arith.mulf %0, %9 : vector<2x8xf32>
    %11 = vector.broadcast %4 : f32 to vector<2x8xf32>
    %12 = arith.addf %10, %11 : vector<2x8xf32>
    %13 = vector.broadcast %2 : f32 to vector<2x8xf32>
    %14 = arith.mulf %0, %13 : vector<2x8xf32>
    %15 = vector.broadcast %5 : f32 to vector<2x8xf32>
    %16 = arith.addf %14, %15 : vector<2x8xf32>
    %17 = vector.broadcast %3 : f32 to vector<2x8xf32>
    %18 = arith.mulf %0, %17 : vector<2x8xf32>
    %19 = vector.broadcast %6 : f32 to vector<2x8xf32>
    %20 = arith.addf %18, %19 : vector<2x8xf32>
    %21 = vector.shape_cast %12 : vector<2x8xf32> to vector<2x8x1xf32>
    %22 = vector.shape_cast %16 : vector<2x8xf32> to vector<2x1x8xf32>
    %23 = vector.broadcast %21 : vector<2x8x1xf32> to vector<2x8x8xf32>
    %24 = vector.broadcast %22 : vector<2x1x8xf32> to vector<2x8x8xf32>
    %25 = arith.mulf %23, %24 : vector<2x8x8xf32>
    %cst = arith.constant dense<0xFF800000> : vector<2x8xf32>
    %26 = vector.multi_reduction <maximumf>, %25, %cst [2] : vector<2x8x8xf32> to vector<2x8xf32>
    %27 = vector.shape_cast %26 : vector<2x8xf32> to vector<2x8x1xf32>
    %28 = vector.broadcast %27 : vector<2x8x1xf32> to vector<2x8x8xf32>
    %29 = arith.subf %25, %28 : vector<2x8x8xf32>
    %30 = math.exp %29 : vector<2x8x8xf32>
    %31 = vector.shape_cast %20 : vector<2x8xf32> to vector<2x1x8xf32>
    %32 = vector.broadcast %31 : vector<2x1x8xf32> to vector<2x8x8xf32>
    %33 = arith.mulf %30, %32 : vector<2x8x8xf32>
    %cst_2 = arith.constant dense<0.000000e+00> : vector<2x8xf32>
    %34 = vector.multi_reduction <add>, %33, %cst_2 [2] : vector<2x8x8xf32> to vector<2x8xf32>
    %cst_3 = arith.constant dense<0.000000e+00> : vector<2x8xf32>
    %35 = vector.multi_reduction <add>, %30, %cst_3 [2] : vector<2x8x8xf32> to vector<2x8xf32>
    %36 = tpu.reciprocal %35 {approx = true} : vector<2x8xf32> -> vector<2x8xf32>
    %37 = arith.mulf %34, %36 : vector<2x8xf32>
    %38 = vector.broadcast %7 : f32 to vector<2x8xf32>
    %39 = arith.mulf %37, %38 : vector<2x8xf32>
    %40 = vector.broadcast %8 : f32 to vector<2x8xf32>
    %41 = arith.addf %39, %40 : vector<2x8xf32>
    %42 = vector.shape_cast %41 : vector<2x8xf32> to vector<1x16xf32>
    %c0_4 = arith.constant 0 : index
    %c0_5 = arith.constant 0 : index
    %43 = vector.load %arg3[%c0_4, %c0_5] : memref<16x1xf32, #tpu.memory_space<vmem>>, vector<16x1xf32>
    %44 = vector.broadcast %43 : vector<16x1xf32> to vector<16x16xf32>
    %45 = vector.broadcast %42 : vector<1x16xf32> to vector<16x16xf32>
    %46 = arith.mulf %44, %45 : vector<16x16xf32>
    %c0_6 = arith.constant 0 : index
    %c0_7 = arith.constant 0 : index
    %47 = vector.load %arg4[%c0_6, %c0_7] : memref<16x1xf32, #tpu.memory_space<vmem>>, vector<16x1xf32>
    %48 = vector.broadcast %47 : vector<16x1xf32> to vector<16x16xf32>
    %49 = arith.addf %46, %48 : vector<16x16xf32>
    %cst_8 = arith.constant 0.000000e+00 : f32
    %50 = vector.broadcast %cst_8 : f32 to vector<16x16xf32>
    %51 = arith.maximumf %49, %50 : vector<16x16xf32>
    %c0_9 = arith.constant 0 : index
    %c0_10 = arith.constant 0 : index
    %52 = vector.load %arg5[%c0_9, %c0_10] : memref<32x16xf32, #tpu.memory_space<vmem>>, vector<32x16xf32>
    %cst_11 = arith.constant dense<0.000000e+00> : vector<32x16xf32>
    %53 = tpu.matmul %52, %51, %cst_11 {dimension_numbers = #tpu.dot_dimension_numbers<[1], [0], [0], [1], [0, 0, 1, 1], [], []>} : vector<32x16xf32>, vector<16x16xf32>, vector<32x16xf32> -> vector<32x16xf32>
    %c0_12 = arith.constant 0 : index
    %c0_13 = arith.constant 0 : index
    %54 = vector.load %arg6[%c0_12, %c0_13] : memref<32x1xf32, #tpu.memory_space<vmem>>, vector<32x1xf32>
    %55 = vector.broadcast %54 : vector<32x1xf32> to vector<32x16xf32>
    %56 = arith.addf %53, %55 : vector<32x16xf32>
    %cst_14 = arith.constant 0.000000e+00 : f32
    %57 = vector.broadcast %cst_14 : f32 to vector<32x16xf32>
    %58 = arith.maximumf %56, %57 : vector<32x16xf32>
    %c0_15 = arith.constant 0 : index
    %c0_16 = arith.constant 0 : index
    %59 = vector.load %arg7[%c0_15, %c0_16] : memref<8x32xf32, #tpu.memory_space<vmem>>, vector<8x32xf32>
    %cst_17 = arith.constant dense<0.000000e+00> : vector<8x16xf32>
    %60 = tpu.matmul %59, %58, %cst_17 {dimension_numbers = #tpu.dot_dimension_numbers<[1], [0], [0], [1], [0, 0, 1, 1], [], []>} : vector<8x32xf32>, vector<32x16xf32>, vector<8x16xf32> -> vector<8x16xf32>
    %c0_18 = arith.constant 0 : index
    %c0_19 = arith.constant 0 : index
    %61 = vector.load %arg8[%c0_18, %c0_19] : memref<8x1xf32, #tpu.memory_space<vmem>>, vector<8x1xf32>
    %62 = vector.broadcast %61 : vector<8x1xf32> to vector<8x16xf32>
    %63 = arith.addf %60, %62 : vector<8x16xf32>
    %c0_20 = arith.constant 0 : index
    %c0_21 = arith.constant 0 : index
    %64 = vector.load %arg9[%c0_20, %c0_21] : memref<8x16xf32, #tpu.memory_space<vmem>>, vector<8x16xf32>
    tpu.vector_store %arg9[%c0_20, %c0_21], %63 {strides = array<i32>} : memref<8x16xf32, #tpu.memory_space<vmem>>, vector<8x16xf32>,
    return
  }
  func.func @transform_0(%arg0: i32) -> i32 {
    %c0_i32 = arith.constant 0 : i32
    %c0_i32_0 = arith.constant 0 : i32
    return %c0_i32 : i32
  }
  func.func @transform_1(%arg0: i32) -> (i32, i32) {
    %c0_i32 = arith.constant 0 : i32
    %c0_i32_0 = arith.constant 0 : i32
    return %arg0, %c0_i32 : i32, i32
  }
  func.func @transform_2(%arg0: i32) -> (i32, i32) {
    %c0_i32 = arith.constant 0 : i32
    %c0_i32_0 = arith.constant 0 : i32
    %c0_i32_1 = arith.constant 0 : i32
    return %c0_i32, %c0_i32_0 : i32, i32
  }
  func.func @transform_3(%arg0: i32) -> (i32, i32) {
    %c0_i32 = arith.constant 0 : i32
    %c0_i32_0 = arith.constant 0 : i32
    %c0_i32_1 = arith.constant 0 : i32
    return %c0_i32, %c0_i32_0 : i32, i32
  }
  func.func @transform_4(%arg0: i32) -> (i32, i32) {
    %c0_i32 = arith.constant 0 : i32
    %c0_i32_0 = arith.constant 0 : i32
    %c0_i32_1 = arith.constant 0 : i32
    return %c0_i32, %c0_i32_0 : i32, i32
  }
  func.func @transform_5(%arg0: i32) -> (i32, i32) {
    %c0_i32 = arith.constant 0 : i32
    %c0_i32_0 = arith.constant 0 : i32
    %c0_i32_1 = arith.constant 0 : i32
    return %c0_i32, %c0_i32_0 : i32, i32
  }
  func.func @transform_6(%arg0: i32) -> (i32, i32) {
    %c0_i32 = arith.constant 0 : i32
    %c0_i32_0 = arith.constant 0 : i32
    %c0_i32_1 = arith.constant 0 : i32
    return %c0_i32, %c0_i32_0 : i32, i32
  }
  func.func @transform_7(%arg0: i32) -> (i32, i32) {
    %c0_i32 = arith.constant 0 : i32
    %c0_i32_0 = arith.constant 0 : i32
    %c0_i32_1 = arith.constant 0 : i32
    return %c0_i32, %c0_i32_0 : i32, i32
  }
  func.func @transform_8(%arg0: i32) -> (i32, i32) {
    %c0_i32 = arith.constant 0 : i32
    %c0_i32_0 = arith.constant 0 : i32
    return %c0_i32, %arg0 : i32, i32
  }
}

</mosaic_0001>

<llo_original>
// kernel: tpu_custom_call.1
$region0: #{tpu_custom_call.1}
  #allocation0 [shape = 'u32[]', space=smem, size = 0x4, offset = 0x4, fixed_abs, tag = 'smem constant byte address 0x4 - core index']
  #allocation1 [shape = 'u32[72,128]{1,0:T(1,128)}', space=vmem, size = 0x9000, scoped, tag = 'internal scratch']
  %s0 = inlined_call_operand.vmem [shape: f32[8], index: 0, kind: input, shape index: {}]
  %s1 = inlined_call_operand.vmem [shape: f32[2,8], index: 1, kind: input, shape index: {}]
  %s2 = inlined_call_operand.vmem [shape: f32[16,1], index: 2, kind: input, shape index: {}]
  %s3 = inlined_call_operand.vmem [shape: f32[16,1], index: 3, kind: input, shape index: {}]
  %s4 = inlined_call_operand.vmem [shape: f32[32,16], index: 4, kind: input, shape index: {}]
  %s5 = inlined_call_operand.vmem [shape: f32[32,1], index: 5, kind: input, shape index: {}]
  %s6 = inlined_call_operand.vmem [shape: f32[8,32], index: 6, kind: input, shape index: {}]
  %s7 = inlined_call_operand.vmem [shape: f32[8,1], index: 7, kind: input, shape index: {}]
  %s8 = inlined_call_operand.hbm [shape: f32[8,16], index: 8, kind: output, shape index: {}]
  %s9 = sld [smem:[#allocation0]]
  $region46: #{tpu_custom_call.1} parent=0
    _
  %s11 = ssub.s32 1, %s9
  %s12 = scalar_select 0, %s11, %s9
  $region1: #{tpu_custom_call.1} parent=0
    #allocation2 [shape = 'u8[512]{0}', space=smem, size = 0x200, scoped, tag = 'input window, operand 0, single buffered']
    #allocation3 [shape = 's32[1]{0}', space=sflag, size = 0x4, scoped, tag = 'scoped memory for tpu_custom_call.1']
    #allocation4 [shape = 's32[1]{0}', space=sflag, size = 0x4, scoped, tag = 'scoped memory for tpu_custom_call.1']
    #allocation5 [shape = 'u8[4096]{0}', space=vmem, size = 0x1000, scoped, tag = 'output window, operand 0, single buffered']
    %13 = vsyncpa [#allocation4], 0
    %14 = vsyncpa [#allocation3], 0
    // Predicated region
    $region2: #{tpu_custom_call.1} parent=1 // pred_check
      _
    $region3: #{tpu_custom_call.1} parent=1 // pred_check_branch
      %16 = sbr.rel (0) target = $region5
    $region4: #{tpu_custom_call.1} parent=1 // pred_region
      %18 = vsyncadd [#allocation4], 0
      %s20 = sshll.u32 %s0, 4
      %s21 = int_to_ptr.vmem [resolvable:$true] %s20
      %23 = dma.vmem_to_smem %s21, 16, [#allocation2], [#allocation4]
    $region5: #{tpu_custom_call.1} parent=1 // pred_fallthru
      _
    // Predicated region
    $region6: #{tpu_custom_call.1} parent=1 // pred_check
      _
    $region7: #{tpu_custom_call.1} parent=1 // pred_check_branch
      %25 = sbr.rel (0) target = $region9
    $region8: #{tpu_custom_call.1} parent=1 // pred_region
      _
    $region9: #{tpu_custom_call.1} parent=1 // pred_fallthru
      _
    // Predicated region
    $region10: #{tpu_custom_call.1} parent=1 // pred_check
      _
    $region11: #{tpu_custom_call.1} parent=1 // pred_check_branch
      %27 = sbr.rel (0) target = $region13
    $region12: #{tpu_custom_call.1} parent=1 // pred_region
      _
    $region13: #{tpu_custom_call.1} parent=1 // pred_fallthru
      _
    // Predicated region
    $region14: #{tpu_custom_call.1} parent=1 // pred_check
      _
    $region15: #{tpu_custom_call.1} parent=1 // pred_check_branch
      %29 = sbr.rel (0) target = $region17
    $region16: #{tpu_custom_call.1} parent=1 // pred_region
      _
    $region17: #{tpu_custom_call.1} parent=1 // pred_fallthru
      _
    // Predicated region
    $region18: #{tpu_custom_call.1} parent=1 // pred_check
      _
    $region19: #{tpu_custom_call.1} parent=1 // pred_check_branch
      %31 = sbr.rel (0) target = $region21
    $region20: #{tpu_custom_call.1} parent=1 // pred_region
      _
    $region21: #{tpu_custom_call.1} parent=1 // pred_fallthru
      _
    // Predicated region
    $region22: #{tpu_custom_call.1} parent=1 // pred_check
      _
    $region23: #{tpu_custom_call.1} parent=1 // pred_check_branch
      %33 = sbr.rel (0) target = $region25
    $region24: #{tpu_custom_call.1} parent=1 // pred_region
      _
    $region25: #{tpu_custom_call.1} parent=1 // pred_fallthru
      _
    // Predicated region
    $region26: #{tpu_custom_call.1} parent=1 // pred_check
      _
    $region27: #{tpu_custom_call.1} parent=1 // pred_check_branch
      %35 = sbr.rel (0) target = $region29
    $region28: #{tpu_custom_call.1} parent=1 // pred_region
      _
    $region29: #{tpu_custom_call.1} parent=1 // pred_fallthru
      _
    // Predicated region
    $region30: #{tpu_custom_call.1} parent=1 // pred_check
      _
    $region31: #{tpu_custom_call.1} parent=1 // pred_check_branch
      %37 = sbr.rel (0) target = $region33
    $region32: #{tpu_custom_call.1} parent=1 // pred_region
      _
    $region33: #{tpu_custom_call.1} parent=1 // pred_fallthru
      _
    // Predicated region
    $region34: #{tpu_custom_call.1} parent=1 // pred_check
      _
    $region35: #{tpu_custom_call.1} parent=1 // pred_check_branch
      %39 = sbr.rel (0) target = $region37
    $region36: #{tpu_custom_call.1} parent=1 // pred_region
      %41 = dma.done [#allocation4], 16
    $region37: #{tpu_custom_call.1} parent=1 // pred_fallthru
      _
    %42 = sfence
    %v43 = vld [vmem:[%s1] sm:$0x3]
    %s44 = sld [smem:[#allocation2]]
    %s45 = sld [smem:[#allocation2 + $0x1]]
    %s46 = sld [smem:[#allocation2 + $0x2]]
    %s47 = sld [smem:[#allocation2 + $0x3]]
    %s48 = sld [smem:[#allocation2 + $0x4]]
    %s49 = sld [smem:[#allocation2 + $0x5]]
    %s50 = sld [smem:[#allocation2 + $0x6]]
    %s51 = sld [smem:[#allocation2 + $0x7]]
    %v52 = vstv %s44
    %v53 = vmul.f32 %v43, %v52
    %v54 = vstv %s47
    %v55 = vadd.f32 %v53, %v54
    %v56 = vstv %s45
    %v57 = vmul.f32 %v43, %v56
    %v58 = vstv %s48
    %v59 = vadd.f32 %v57, %v58
    %v60 = vstv %s46
    %v61 = vmul.f32 %v43, %v60
    %v62 = vstv %s49
    %v63 = vadd.f32 %v61, %v62
    %v64 = vperm.slane %v55, 0
    %v65 = vlaneseq
    %v66 = vshrl.u32 %v65, 7
    %68 = vset.pattern.permute.xlu0 %v66
    %69 = vperm.xlu0 %68, %v64
    %v70 = vpop.permute.xlu0 %69
    %v71 = vperm.slane %v55, 1
    %v72 = vlaneseq
    %v73 = vshrl.u32 %v72, 7
    %75 = vset.pattern.permute.xlu0 %v73
    %76 = vperm.xlu0 %75, %v71
    %v77 = vpop.permute.xlu0 %76
    %v79 = vrot.slane %v59, 1
    %v80 = vperm.slane %v59, 0
    %v81 = vperm.slane %v79, 0
    %v84 = vmul.f32 %v70, %v80
    %v85 = vmul.f32 %v77, %v81
    %vm86 = vcmask 64512
    %v87 = vsel %vm86, %v84, -inf
    %88 = vmax.xlane.f32.xlu0 %v87
    %v89 = vpop.xlane.xlu0 %88
    %v90 = vsel %vm86, %v85, -inf
    %91 = vmax.xlane.f32.xlu0 %v90
    %v92 = vpop.xlane.xlu0 %91
    %v93 = vsub.f32 %v84, %v89
    %v94 = vsub.f32 %v85, %v92
    %v95 = vmul.f32 %v93, 1.442695
    %v96 = vpow.pop %v95
    %v97 = vmul.f32 %v94, 1.442695
    %v98 = vpow.pop %v97
    %v100 = vrot.slane %v63, 1
    %v101 = vperm.slane %v63, 0
    %v102 = vperm.slane %v100, 0
    %v105 = vmul.f32 %v96, %v101
    %v106 = vmul.f32 %v98, %v102
    %v107 = vsel %vm86, %v105, 0.0
    %108 = vadd.xlane.f32.xlu0 %v107
    %v109 = vpop.xlane.xlu0 %108
    %v110 = vsel %vm86, %v106, 0.0
    %111 = vadd.xlane.f32.xlu0 %v110
    %v112 = vpop.xlane.xlu0 %111
    %v113 = vsel %vm86, %v96, 0.0
    %114 = vadd.xlane.f32.xlu0 %v113
    %v115 = vpop.xlane.xlu0 %114
    %v116 = vsel %vm86, %v98, 0.0
    %117 = vadd.xlane.f32.xlu0 %v116
    %v118 = vpop.xlane.xlu0 %117
    %v119 = vrcp.pop %v115
    %v120 = vrcp.pop %v118
    %v121 = vmul.f32 %v109, %v119
    %v122 = vmul.f32 %v112, %v120
    %v123 = vstv %s50
    %v124 = vmul.f32 %v121, %v123
    %v125 = vmul.f32 %v122, %v123
    %v126 = vstv %s51
    %v127 = vadd.f32 %v124, %v126
    %v128 = vadd.f32 %v125, %v126
    %v129 = vld [vmem:[%s2] sm:$0xff]
    %v130 = vld [vmem:[%s2 + $0x8] sm:$0xff]
    %132 = vset.pattern.permute.xlu0 0
    %133 = vperm.xlu0 %132, %v129
    %v134 = vpop.permute.xlu0 %133
    %137 = vset.pattern.permute.xlu0 0
    %138 = vperm.xlu0 %137, %v130
    %v139 = vpop.permute.xlu0 %138
    %v143 = vlaneseq
    %v144 = vand.u32 %v143, 127
    %v145 = vperm.slane %v127, %v144
    %v146 = vadd.s32 %v144, 4294967288
    %v147 = vperm.slane %v128, %v146
    %vm148 = vcmask 130112
    %v149 = vsel %vm148, %v147, %v145
    %vm150 = vcmask 1042434
    %v151 = vsel %vm150, %v149, %v149
    %vm152 = vcmask 1043459
    %v153 = vsel %vm152, %v149, %v151
    %vm154 = vcmask 1044484
    %v155 = vsel %vm154, %v149, %v153
    %vm156 = vcmask 1045509
    %v157 = vsel %vm156, %v149, %v155
    %vm158 = vcmask 1046534
    %v159 = vsel %vm158, %v149, %v157
    %vm160 = vcmask 1047559
    %v161 = vsel %vm160, %v149, %v159
    %v163 = vmul.f32 %v134, %v161
    %v164 = vmul.f32 %v139, %v161
    %v165 = vld [vmem:[%s3] sm:$0xff]
    %v166 = vld [vmem:[%s3 + $0x8] sm:$0xff]
    %168 = vset.pattern.permute.xlu0 0
    %169 = vperm.xlu0 %168, %v165
    %v170 = vpop.permute.xlu0 %169
    %173 = vset.pattern.permute.xlu0 0
    %174 = vperm.xlu0 %173, %v166
    %v175 = vpop.permute.xlu0 %174
    %v177 = vadd.f32 %v163, %v170
    %v178 = vadd.f32 %v164, %v175
    %v179 = vmax.f32 %v177, 0.0
    %v180 = vmax.f32 %v178, 0.0
    %v181 = vld [vmem:[%s4] sm:$0xff]
    %v182 = vld [vmem:[%s4 + $0x8] sm:$0xff]
    %v183 = vld [vmem:[%s4 + $0x10] sm:$0xff]
    %v184 = vld [vmem:[%s4 + $0x18] sm:$0xff]
    %v185 = vld [vmem:[%s5] sm:$0xff]
    %v186 = vld [vmem:[%s5 + $0x8] sm:$0xff]
    %v187 = vld [vmem:[%s5 + $0x10] sm:$0xff]
    %v188 = vld [vmem:[%s5 + $0x18] sm:$0xff]
    %190 = vset.pattern.permute.xlu0 0
    %191 = vperm.xlu0 %190, %v185
    %v192 = vpop.permute.xlu0 %191
    %195 = vset.pattern.permute.xlu0 0
    %196 = vperm.xlu0 %195, %v186
    %v197 = vpop.permute.xlu0 %196
    %200 = vset.pattern.permute.xlu0 0
    %201 = vperm.xlu0 %200, %v187
    %v202 = vpop.permute.xlu0 %201
    %205 = vset.pattern.permute.xlu0 0
    %206 = vperm.xlu0 %205, %v188
    %v207 = vpop.permute.xlu0 %206
    %vm209 = vcmask 130048
    %v211 = vsel %vm209, %v181, 0
    %v214 = vsel %vm209, %v182, 0
    %v217 = vsel %vm209, %v183, 0
    %v220 = vsel %vm209, %v184, 0
    %222 = vmatpush.msra.mxu0 0.0
    %223 = vmatpush.msra.mxu0 0.0
    %224 = vmatpush.msra.mxu0 0.0
    %225 = vmatpush.msra.mxu0 0.0
    %226 = vmatpush.msra.mxu0 0.0
    %227 = vmatpush.msra.mxu0 0.0
    %228 = vmatpush.msra.mxu0 0.0
    %229 = vmatpush.msra.mxu0 0.0
    %230 = vmatpush.msra.mxu0 0.0
    %231 = vmatpush.msra.mxu0 0.0
    %232 = vmatpush.msra.mxu0 0.0
    %233 = vmatpush.msra.mxu0 0.0
    %234 = vmatpush.msra.mxu0 0.0
    %235 = vmatpush.msra.mxu0 0.0
    %236 = vmatpush.msra.mxu0 %v180
    %237 = vmatpush.msra.mxu0 %v179
    %238 = vmatmul.f32.gmra.mxu0 %v211
    %v239 = vpop.f32.mrf.mxu0
    %v240 = vadd.f32 %v192, %v239
    %241 = vmatmul.f32.gmra.mxu0 %v214
    %v242 = vpop.f32.mrf.mxu0
    %v243 = vadd.f32 %v197, %v242
    %244 = vmatmul.f32.gmra.mxu0 %v217
    %v245 = vpop.f32.mrf.mxu0
    %v246 = vadd.f32 %v202, %v245
    %247 = vmatmul.f32.gmra.mxu0 %v220
    %v248 = vpop.f32.mrf.mxu0
    %v249 = vadd.f32 %v207, %v248
    %250 = vdwg.mxu0
    %v251 = vmax.f32 %v240, 0.0
    %v252 = vmax.f32 %v243, 0.0
    %v253 = vmax.f32 %v246, 0.0
    %v254 = vmax.f32 %v249, 0.0
    %v255 = vld [vmem:[%s6] sm:$0xff]
    %v256 = vld [vmem:[%s7] sm:$0xff]
    %258 = vset.pattern.permute.xlu0 0
    %259 = vperm.xlu0 %258, %v256
    %v260 = vpop.permute.xlu0 %259
    %vm262 = vcmask 261120
    %v264 = vsel %vm262, %v255, 0
    %266 = vmatpush.msra.mxu0 0.0
    %267 = vmatpush.msra.mxu0 0.0
    %268 = vmatpush.msra.mxu0 0.0
    %269 = vmatpush.msra.mxu0 0.0
    %270 = vmatpush.msra.mxu0 0.0
    %271 = vmatpush.msra.mxu0 0.0
    %272 = vmatpush.msra.mxu0 0.0
    %273 = vmatpush.msra.mxu0 0.0
    %274 = vmatpush.msra.mxu0 0.0
    %275 = vmatpush.msra.mxu0 0.0
    %276 = vmatpush.msra.mxu0 0.0
    %277 = vmatpush.msra.mxu0 0.0
    %278 = vmatpush.msra.mxu0 %v254
    %279 = vmatpush.msra.mxu0 %v253
    %280 = vmatpush.msra.mxu0 %v252
    %281 = vmatpush.msra.mxu0 %v251
    %282 = vmatmul.f32.gmra.mxu0 %v264
    %v283 = vpop.f32.mrf.mxu0
    %v284 = vadd.f32 %v260, %v283
    %285 = vdwg.mxu0
    %286 = vst.msk [vmem:[#allocation5] sm:$0xff] %vm209, %v284
    // Predicated region
    $region38: #{tpu_custom_call.1} parent=1 // pred_check
      _
    $region39: #{tpu_custom_call.1} parent=1 // pred_check_branch
      %288 = sbr.rel (0) target = $region41
    $region40: #{tpu_custom_call.1} parent=1 // pred_region
      %290 = vsyncadd [#allocation3], 0
      %s292 = sshll.u32 [#allocation5], 4
      %s293 = int_to_ptr.vmem [resolvable:$true] %s292
      %s294 = sshll.u32 %s8, 4
      %s295 = int_to_ptr.hbm [resolvable:$true] %s294
      %297 = dma.vmem_to_hbm [thread:$0]  %s293, 128, %s295, [#allocation3]
    $region41: #{tpu_custom_call.1} parent=1 // pred_fallthru
      _
    // Predicated region
    $region42: #{tpu_custom_call.1} parent=1 // pred_check
      _
    $region43: #{tpu_custom_call.1} parent=1 // pred_check_branch
      %299 = sbr.rel (0) target = $region45
    $region44: #{tpu_custom_call.1} parent=1 // pred_region
      %301 = dma.done [#allocation3], 128
    $region45: #{tpu_custom_call.1} parent=1 // pred_fallthru
      _
    %302 = vsyncpa [#allocation3], 1
    %303 = vsyncpa [#allocation4], 1

</llo_original>
